<compile_context>
chip_gen: v7x
topology: tpu7x:2x2x1
jax: 0.10.0
libtpu: 0.0.40
codegen_flags: <defaults>
</compile_context>

<pallas_src>
import jax
import jax.numpy as jnp
from jax import lax
from jax.experimental import pallas as pl
from jax.experimental.pallas import tpu as pltpu


def _mmd_kernel(fsp_ref, fcp_ref, wa_ref, wb_ref, bias_ref, w1_ref, w2_ref,
                o_ref):
    # fsp_ref:  (1, C1, HW)   bf16   first half of the channel concat
    # fcp_ref:  (1, C2, HW)   bf16   second half of the channel concat
    # wa_ref:   (Cout, C1)    bf16   BN-scale-folded 1x1 conv weight (fsp part)
    # wb_ref:   (Cout, C2)    bf16   BN-scale-folded 1x1 conv weight (fcp part)
    # bias_ref: (Cout, 1)     f32    folded BN bias
    # w1_ref:   (Cmid, Cout)  f32    squeeze 1x1 conv (no bias)
    # w2_ref:   (Cout, Cmid)  f32    excite 1x1 conv (no bias)
    # o_ref:    (1, Cout, HW) f32
    Cout = o_ref.shape[1]

    # ConvBNReLU(ks=1) on the (virtual) concat: two MXU matmuls, f32 accum.
    feat = jnp.dot(wa_ref[...], fsp_ref[0], preferred_element_type=jnp.float32)
    feat = feat + jnp.dot(wb_ref[...], fcp_ref[0],
                          preferred_element_type=jnp.float32)
    feat = jnp.maximum(feat + bias_ref[...], 0.0)           # (Cout, HW) f32

    # Global average pool over the spatial (lane) axis -> XLU reduction.
    m = jnp.mean(feat, axis=1, keepdims=True)               # (Cout, 1)
    # Broadcast to a full 128-lane tile so both excite matmuls have a
    # non-degenerate, lane-aligned N dimension (a (K,1) matvec would waste the
    # MXU and stress lowering; 128 identical columns are effectively free).
    m_b = jnp.broadcast_to(m, (Cout, 128))                  # (Cout, 128)

    a = jnp.dot(w1_ref[...], m_b, preferred_element_type=jnp.float32)
    a = jnp.maximum(a, 0.0)                                  # (Cmid, 128)
    a = jnp.dot(w2_ref[...], a, preferred_element_type=jnp.float32)
    a = a[:, 0:1]                                            # (Cout, 1)
    atten = 1.0 / (1.0 + jnp.exp(-a))                        # sigmoid (EUP)

    # feat * atten + feat
    o_ref[0] = (feat * (1.0 + atten)).astype(o_ref.dtype)


def multimodal_distillation(fsp, fcp_target, w_convblk, bn_gamma, bn_beta,
                            bn_mean, bn_var, w_conv1, w_conv2,
                            fcp_others=(), eps=1e-5):
    """fsp: (N, C1, H, W), fcp_target: (N, C2, H, W);
    w_convblk: (Cout, C1+C2, 1, 1) torch OIHW (bias=False);
    w_conv1: (Cout//4, Cout, 1, 1); w_conv2: (Cout, Cout//4, 1, 1).
    Returns feat * sigmoid-attention + feat, shape (N, Cout, H, W)."""
    del fcp_others  # Unused on the num_others > 0 path (matches the module).
    # TODO(synk): the module's `num_others == 0` branch indexes an empty layer
    # list (it only "works" when fcp_others is also empty, returning fcat);
    # that degenerate path is not implemented here.

    N, C1, H, W = fsp.shape
    C2 = fcp_target.shape[1]
    Cout = w_convblk.shape[0]
    Cmid = w_conv1.shape[0]
    HW = H * W

    # Fold BatchNorm (eval, running stats) into the 1x1 conv:
    #   W' = scale * W,  b = beta - mean * scale,  scale = gamma/sqrt(var+eps)
    scale = (bn_gamma / jnp.sqrt(bn_var + eps)).astype(jnp.float32)        # (Cout,)
    w_fused = w_convblk[:, :, 0, 0].astype(jnp.float32) * scale[:, None]   # (Cout, Cin)
    bias = (bn_beta - bn_mean * scale).reshape(Cout, 1).astype(jnp.float32)

    # Split the fused weight so the channel concat never hits HBM.
    w_a = w_fused[:, :C1].astype(jnp.bfloat16)
    w_b = w_fused[:, C1:].astype(jnp.bfloat16)
    w1 = w_conv1[:, :, 0, 0].astype(jnp.float32)   # (Cmid, Cout)
    w2 = w_conv2[:, :, 0, 0].astype(jnp.float32)   # (Cout, Cmid)

    # NCHW -> (N, C, H*W): contiguous reshape, no transpose / pad round trips.
    # Last dim HW (= 256 here) is a multiple of 128 -> lane-dense DMA + stores.
    fsp_r = fsp.reshape(N, C1, HW).astype(jnp.bfloat16)
    fcp_r = fcp_target.reshape(N, C2, HW).astype(jnp.bfloat16)

    out_flat = pl.pallas_call(
        _mmd_kernel,
        out_shape=jax.ShapeDtypeStruct((N, Cout, HW), jnp.float32),
        grid_spec=pltpu.PrefetchScalarGridSpec(
            num_scalar_prefetch=0,
            grid=(N,),
            in_specs=[
                pl.BlockSpec((1, C1, HW), lambda n: (n, 0, 0)),
                pl.BlockSpec((1, C2, HW), lambda n: (n, 0, 0)),
                pl.BlockSpec((Cout, C1), lambda n: (0, 0)),
                pl.BlockSpec((Cout, C2), lambda n: (0, 0)),
                pl.BlockSpec((Cout, 1), lambda n: (0, 0)),
                pl.BlockSpec((Cmid, Cout), lambda n: (0, 0)),
                pl.BlockSpec((Cout, Cmid), lambda n: (0, 0)),
            ],
            out_specs=pl.BlockSpec((1, Cout, HW), lambda n: (n, 0, 0)),
        ),
        compiler_params=pltpu.CompilerParams(
            dimension_semantics=("parallel",),  # batch split across TensorCores
        ),
    )(fsp_r, fcp_r, w_a, w_b, bias, w1, w2)

    return out_flat.reshape(N, Cout, H, W)


def _reference(fsp, fcp_target, w_convblk, bn_gamma, bn_beta, bn_mean, bn_var,
               w_conv1, w_conv2, eps=1e-5):
    """Pure-JAX f32 reference matching the PyTorch forward (eval BN)."""
    fcat = jnp.concatenate([fsp, fcp_target], axis=1)
    feat = lax.conv_general_dilated(
        fcat, w_convblk, (1, 1), ((0, 0), (0, 0)),
        dimension_numbers=("NCHW", "OIHW", "NCHW"))
    scale = bn_gamma / jnp.sqrt(bn_var + eps)
    shift = bn_beta - bn_mean * scale
    feat = jnp.maximum(
        feat * scale[None, :, None, None] + shift[None, :, None, None], 0.0)
    atten = jnp.mean(feat, axis=(2, 3), keepdims=True)   # global avg pool
    atten = lax.conv_general_dilated(
        atten, w_conv1, (1, 1), ((0, 0), (0, 0)),
        dimension_numbers=("NCHW", "OIHW", "NCHW"))
    atten = jnp.maximum(atten, 0.0)
    atten = lax.conv_general_dilated(
        atten, w_conv2, (1, 1), ((0, 0), (0, 0)),
        dimension_numbers=("NCHW", "OIHW", "NCHW"))
    atten = jax.nn.sigmoid(atten)
    return feat * atten + feat


if __name__ == "__main__":
    # MultiModalDistillation(in_chan=8, out_chan=32, num_others=1):
    # fsp and fcp_target each carry in_chan // 2 = 4 channels.
    N, C_half, H, W = 2, 4, 16, 16
    Cin = 2 * C_half          # in_chan
    Cout = 32                 # out_chan
    Cmid = Cout // 4          # 8

    key = jax.random.PRNGKey(0)
    (k_fsp, k_fcp, k_w0, k_w1, k_w2,
     k_g, k_b, k_m, k_v) = jax.random.split(key, 9)

    fsp = jax.random.normal(k_fsp, (N, C_half, H, W), jnp.float32)
    fcp_target = jax.random.normal(k_fcp, (N, C_half, H, W), jnp.float32)

    # Kaiming-normal(a=1) style init (gain=1, std=1/sqrt(fan_in)); no conv bias.
    w_convblk = jax.random.normal(k_w0, (Cout, Cin, 1, 1), jnp.float32) * (1.0 / Cin) ** 0.5
    w_conv1 = jax.random.normal(k_w1, (Cmid, Cout, 1, 1), jnp.float32) * (1.0 / Cout) ** 0.5
    w_conv2 = jax.random.normal(k_w2, (Cout, Cmid, 1, 1), jnp.float32) * (1.0 / Cmid) ** 0.5

    # BatchNorm2d eval-mode parameters / running stats.
    bn_gamma = 1.0 + 0.1 * jax.random.normal(k_g, (Cout,), jnp.float32)
    bn_beta = 0.1 * jax.random.normal(k_b, (Cout,), jnp.float32)
    bn_mean = 0.05 * jax.random.normal(k_m, (Cout,), jnp.float32)
    bn_var = 1.0 + 0.1 * jnp.abs(jax.random.normal(k_v, (Cout,), jnp.float32))

    out = multimodal_distillation(fsp, fcp_target, w_convblk, bn_gamma, bn_beta,
                                  bn_mean, bn_var, w_conv1, w_conv2)
    out = jax.block_until_ready(out)

    ref = _reference(fsp, fcp_target, w_convblk, bn_gamma, bn_beta, bn_mean,
                     bn_var, w_conv1, w_conv2)
    assert out.shape == (N, Cout, H, W)
    # bf16 matmul operands (f32 accumulation) vs pure-f32 reference -> loosened
    # tolerance, as flagged in the performance review.
    assert jnp.allclose(out, ref, atol=5e-2, rtol=5e-2), "mismatch vs reference"

    print("KERNEL_OK")
</pallas_src>

<mosaic_0001>
module attributes {stable_mosaic.version = 11 : i64} {
  func.func @_mmd_kernel(%arg0: i32, %arg1: memref<1x4x256xbf16, #tpu.memory_space<vmem>>, %arg2: memref<1x4x256xbf16, #tpu.memory_space<vmem>>, %arg3: memref<32x4xbf16, #tpu.memory_space<vmem>>, %arg4: memref<32x4xbf16, #tpu.memory_space<vmem>>, %arg5: memref<32x1xf32, #tpu.memory_space<vmem>>, %arg6: memref<8x32xf32, #tpu.memory_space<vmem>>, %arg7: memref<32x8xf32, #tpu.memory_space<vmem>>, %arg8: memref<1x32x256xf32, #tpu.memory_space<vmem>>) attributes {dimension_semantics = [#tpu.dimension_semantics<parallel>], iteration_bounds = array<i64: 2>, scalar_prefetch = 0 : i64, scratch_operands = 0 : i64, tpu.core_type = #tpu.core_type<tc>, window_params = [{transform_indices = @transform_0, window_bounds = array<i64: 1, 4, 256>}, {transform_indices = @transform_1, window_bounds = array<i64: 1, 4, 256>}, {pipeline_mode = #tpu.pipeline_mode<synchronous>, transform_indices = @transform_2, window_bounds = array<i64: 32, 4>}, {pipeline_mode = #tpu.pipeline_mode<synchronous>, transform_indices = @transform_3, window_bounds = array<i64: 32, 4>}, {pipeline_mode = #tpu.pipeline_mode<synchronous>, transform_indices = @transform_4, window_bounds = array<i64: 32, 1>}, {pipeline_mode = #tpu.pipeline_mode<synchronous>, transform_indices = @transform_5, window_bounds = array<i64: 8, 32>}, {pipeline_mode = #tpu.pipeline_mode<synchronous>, transform_indices = @transform_6, window_bounds = array<i64: 32, 8>}, {transform_indices = @transform_7, window_bounds = array<i64: 1, 32, 256>}]} {
    %c0 = arith.constant 0 : index
    %c0_0 = arith.constant 0 : index
    %0 = vector.load %arg3[%c0, %c0_0] : memref<32x4xbf16, #tpu.memory_space<vmem>>, vector<32x4xbf16>
    %c0_1 = arith.constant 0 : index
    %c0_2 = arith.constant 0 : index
    %c0_3 = arith.constant 0 : index
    %1 = vector.load %arg1[%c0_1, %c0_2, %c0_3] : memref<1x4x256xbf16, #tpu.memory_space<vmem>>, vector<1x4x256xbf16>
    %2 = vector.shape_cast %1 : vector<1x4x256xbf16> to vector<4x256xbf16>
    %cst = arith.constant dense<0.000000e+00> : vector<32x256xf32>
    %3 = tpu.matmul %0, %2, %cst {dimension_numbers = #tpu.dot_dimension_numbers<[1], [0], [0], [1], [0, 0, 1, 1], [], []>} : vector<32x4xbf16>, vector<4x256xbf16>, vector<32x256xf32> -> vector<32x256xf32>
    %c0_4 = arith.constant 0 : index
    %c0_5 = arith.constant 0 : index
    %4 = vector.load %arg4[%c0_4, %c0_5] : memref<32x4xbf16, #tpu.memory_space<vmem>>, vector<32x4xbf16>
    %c0_6 = arith.constant 0 : index
    %c0_7 = arith.constant 0 : index
    %c0_8 = arith.constant 0 : index
    %5 = vector.load %arg2[%c0_6, %c0_7, %c0_8] : memref<1x4x256xbf16, #tpu.memory_space<vmem>>, vector<1x4x256xbf16>
    %6 = vector.shape_cast %5 : vector<1x4x256xbf16> to vector<4x256xbf16>
    %cst_9 = arith.constant dense<0.000000e+00> : vector<32x256xf32>
    %7 = tpu.matmul %4, %6, %cst_9 {dimension_numbers = #tpu.dot_dimension_numbers<[1], [0], [0], [1], [0, 0, 1, 1], [], []>} : vector<32x4xbf16>, vector<4x256xbf16>, vector<32x256xf32> -> vector<32x256xf32>
    %8 = arith.addf %3, %7 : vector<32x256xf32>
    %c0_10 = arith.constant 0 : index
    %c0_11 = arith.constant 0 : index
    %9 = vector.load %arg5[%c0_10, %c0_11] : memref<32x1xf32, #tpu.memory_space<vmem>>, vector<32x1xf32>
    %10 = vector.broadcast %9 : vector<32x1xf32> to vector<32x256xf32>
    %11 = arith.addf %8, %10 : vector<32x256xf32>
    %cst_12 = arith.constant 0.000000e+00 : f32
    %12 = vector.broadcast %cst_12 : f32 to vector<32x256xf32>
    %13 = arith.maximumf %11, %12 : vector<32x256xf32>
    %cst_13 = arith.constant dense<0.000000e+00> : vector<32xf32>
    %14 = vector.multi_reduction <add>, %13, %cst_13 [1] : vector<32x256xf32> to vector<32xf32>
    %15 = vector.shape_cast %14 : vector<32xf32> to vector<32x1xf32>
    %cst_14 = arith.constant 2.560000e+02 : f32
    %16 = vector.broadcast %cst_14 : f32 to vector<32x1xf32>
    %17 = arith.divf %15, %16 : vector<32x1xf32>
    %18 = vector.shape_cast %17 : vector<32x1xf32> to vector<32x1xf32>
    %19 = vector.broadcast %18 : vector<32x1xf32> to vector<32x128xf32>
    %c0_15 = arith.constant 0 : index
    %c0_16 = arith.constant 0 : index
    %20 = vector.load %arg6[%c0_15, %c0_16] : memref<8x32xf32, #tpu.memory_space<vmem>>, vector<8x32xf32>
    %cst_17 = arith.constant dense<0.000000e+00> : vector<8x128xf32>
    %21 = tpu.matmul %20, %19, %cst_17 {dimension_numbers = #tpu.dot_dimension_numbers<[1], [0], [0], [1], [0, 0, 1, 1], [], []>} : vector<8x32xf32>, vector<32x128xf32>, vector<8x128xf32> -> vector<8x128xf32>
    %cst_18 = arith.constant 0.000000e+00 : f32
    %22 = vector.broadcast %cst_18 : f32 to vector<8x128xf32>
    %23 = arith.maximumf %21, %22 : vector<8x128xf32>
    %c0_19 = arith.constant 0 : index
    %c0_20 = arith.constant 0 : index
    %24 = vector.load %arg7[%c0_19, %c0_20] : memref<32x8xf32, #tpu.memory_space<vmem>>, vector<32x8xf32>
    %cst_21 = arith.constant dense<0.000000e+00> : vector<32x128xf32>
    %25 = tpu.matmul %24, %23, %cst_21 {dimension_numbers = #tpu.dot_dimension_numbers<[1], [0], [0], [1], [0, 0, 1, 1], [], []>} : vector<32x8xf32>, vector<8x128xf32>, vector<32x128xf32> -> vector<32x128xf32>
    %26 = vector.extract_strided_slice %25 {offsets = [0, 0], sizes = [32, 1], strides = [1, 1]} : vector<32x128xf32> to vector<32x1xf32>
    %cst_22 = arith.constant 0.000000e+00 : f32
    %27 = vector.broadcast %cst_22 : f32 to vector<32x1xf32>
    %28 = arith.subf %27, %26 : vector<32x1xf32>
    %29 = math.exp %28 : vector<32x1xf32>
    %cst_23 = arith.constant 1.000000e+00 : f32
    %30 = vector.broadcast %cst_23 : f32 to vector<32x1xf32>
    %31 = arith.addf %30, %29 : vector<32x1xf32>
    %cst_24 = arith.constant 1.000000e+00 : f32
    %32 = vector.broadcast %cst_24 : f32 to vector<32x1xf32>
    %33 = arith.divf %32, %31 : vector<32x1xf32>
    %cst_25 = arith.constant 1.000000e+00 : f32
    %34 = vector.broadcast %cst_25 : f32 to vector<32x1xf32>
    %35 = arith.addf %34, %33 : vector<32x1xf32>
    %36 = vector.broadcast %35 : vector<32x1xf32> to vector<32x256xf32>
    %37 = arith.mulf %13, %36 : vector<32x256xf32>
    %c0_26 = arith.constant 0 : index
    %c0_27 = arith.constant 0 : index
    %c0_28 = arith.constant 0 : index
    %38 = vector.load %arg8[%c0_26, %c0_27, %c0_28] : memref<1x32x256xf32, #tpu.memory_space<vmem>>, vector<1x32x256xf32>
    %39 = vector.shape_cast %38 : vector<1x32x256xf32> to vector<32x256xf32>
    %40 = vector.shape_cast %37 : vector<32x256xf32> to vector<1x32x256xf32>
    tpu.vector_store %arg8[%c0_26, %c0_27, %c0_28], %40 {strides = array<i32>} : memref<1x32x256xf32, #tpu.memory_space<vmem>>, vector<1x32x256xf32>,
    return
  }
  func.func @transform_0(%arg0: i32) -> (i32, i32, i32) {
    %c0_i32 = arith.constant 0 : i32
    %c0_i32_0 = arith.constant 0 : i32
    %c0_i32_1 = arith.constant 0 : i32
    return %arg0, %c0_i32, %c0_i32_0 : i32, i32, i32
  }
  func.func @transform_1(%arg0: i32) -> (i32, i32, i32) {
    %c0_i32 = arith.constant 0 : i32
    %c0_i32_0 = arith.constant 0 : i32
    %c0_i32_1 = arith.constant 0 : i32
    return %arg0, %c0_i32, %c0_i32_0 : i32, i32, i32
  }
  func.func @transform_2(%arg0: i32) -> (i32, i32) {
    %c0_i32 = arith.constant 0 : i32
    %c0_i32_0 = arith.constant 0 : i32
    %c0_i32_1 = arith.constant 0 : i32
    return %c0_i32, %c0_i32_0 : i32, i32
  }
  func.func @transform_3(%arg0: i32) -> (i32, i32) {
    %c0_i32 = arith.constant 0 : i32
    %c0_i32_0 = arith.constant 0 : i32
    %c0_i32_1 = arith.constant 0 : i32
    return %c0_i32, %c0_i32_0 : i32, i32
  }
  func.func @transform_4(%arg0: i32) -> (i32, i32) {
    %c0_i32 = arith.constant 0 : i32
    %c0_i32_0 = arith.constant 0 : i32
    %c0_i32_1 = arith.constant 0 : i32
    return %c0_i32, %c0_i32_0 : i32, i32
  }
  func.func @transform_5(%arg0: i32) -> (i32, i32) {
    %c0_i32 = arith.constant 0 : i32
    %c0_i32_0 = arith.constant 0 : i32
    %c0_i32_1 = arith.constant 0 : i32
    return %c0_i32, %c0_i32_0 : i32, i32
  }
  func.func @transform_6(%arg0: i32) -> (i32, i32) {
    %c0_i32 = arith.constant 0 : i32
    %c0_i32_0 = arith.constant 0 : i32
    %c0_i32_1 = arith.constant 0 : i32
    return %c0_i32, %c0_i32_0 : i32, i32
  }
  func.func @transform_7(%arg0: i32) -> (i32, i32, i32) {
    %c0_i32 = arith.constant 0 : i32
    %c0_i32_0 = arith.constant 0 : i32
    %c0_i32_1 = arith.constant 0 : i32
    return %arg0, %c0_i32, %c0_i32_0 : i32, i32, i32
  }
}

</mosaic_0001>

<llo_original>
// kernel: tpu_custom_call.1
$region0: #{tpu_custom_call.1}
  #allocation0 [shape = 'u32[]', space=smem, size = 0x4, offset = 0x4, fixed_abs, tag = 'smem constant byte address 0x4 - core index']
  #allocation1 [shape = 'u32[144,128]{1,0:T(1,128)}', space=vmem, size = 0x12000, scoped, tag = 'internal scratch']
  %s0 = inlined_call_operand.vmem [shape: bf16[2,4,256], index: 0, kind: input, shape index: {}]
  %s1 = inlined_call_operand.vmem [shape: bf16[2,4,256], index: 1, kind: input, shape index: {}]
  %s2 = inlined_call_operand.vmem [shape: bf16[32,4], index: 2, kind: input, shape index: {}]
  %s3 = inlined_call_operand.vmem [shape: bf16[32,4], index: 3, kind: input, shape index: {}]
  %s4 = inlined_call_operand.vmem [shape: f32[32,1], index: 4, kind: input, shape index: {}]
  %s5 = inlined_call_operand.vmem [shape: f32[8,32], index: 5, kind: input, shape index: {}]
  %s6 = inlined_call_operand.vmem [shape: f32[32,8], index: 6, kind: input, shape index: {}]
  %s7 = inlined_call_operand.hbm [shape: f32[2,32,256], index: 7, kind: output, shape index: {}]
  %s8 = sld [smem:[#allocation0]]
  $region61: #{tpu_custom_call.1} parent=0
    _
  %s10 = ssub.s32 1, %s8
  %s11 = scalar_select 0, %s10, %s8
  $region1: #{tpu_custom_call.1} parent=0
    #allocation2 [shape = 'u8[65536]{0}', space=vmem, size = 0x10000, scoped, tag = 'output window, operand 0']
    #allocation3 [shape = 's32[2]{0}', space=sflag, size = 0x8, scoped, tag = 'scoped memory for tpu_custom_call.1']
    %12 = vsyncpa [#allocation3], 0
    %s13 = scalar_lea.sflag [#allocation3], 1
    %14 = vsyncpa %s13, 0
    loop: start=0, step=1, limit=4
    $region2: #{tpu_custom_call.1} parent=1 // loop_pre_header
      _
    $region3: #{tpu_custom_call.1} parent=1 // loop_header
      %s16 = sphi 0, %s20
      %p17 = scmp.ge.s32.totalorder %s16, 4
      %s26 = sphi 0, %s28
      %s29 = sphi 0, %s26
      %s30 = sphi 0, %s29
      %s46 = sphi 0, %s30
      %s52 = sphi 0, %s54
      %s55 = sphi 0, %s52
      %s56 = sphi 0, %s55
      %s72 = sphi 0, %s56
      %s76 = sphi 0, %s76
      %s78 = sphi 0, %s76
      %s79 = sphi 0, %s78
      %s93 = sphi 0, %s79
      %s97 = sphi 0, %s97
      %s99 = sphi 0, %s97
      %s100 = sphi 0, %s99
      %s114 = sphi 0, %s100
      %s118 = sphi 0, %s118
      %s120 = sphi 0, %s118
      %s121 = sphi 0, %s120
      %s135 = sphi 0, %s121
      %s139 = sphi 0, %s139
      %s141 = sphi 0, %s139
      %s142 = sphi 0, %s141
      %s156 = sphi 0, %s142
      %s160 = sphi 0, %s160
      %s162 = sphi 0, %s160
      %s163 = sphi 0, %s162
      %s177 = sphi 0, %s163
      %s183 = sphi 0, %s185
      %s186 = sphi 0, %s183
      %s187 = sphi 0, %s186
      %s203 = sphi 0, %s187
    $region4: #{tpu_custom_call.1} parent=1 // loop_header_branch
      %19 = sbr.rel (%p17) target = $region8
    $region5: #{tpu_custom_call.1} parent=1 // loop_body
      %s21 = ssub.s32 %s16, 1
      %s22 = ssub.s32 %s16, 2
      %s23 = sadd.s32 %s16, 1
      %s24 = ssub.s32 %s16, %s23
      %p25 = scmp.eq.s32.totalorder %s24, 0
      %s27 = sadd.s32 %s26, 1
      %s28 = scalar_select %p25, %s26, %s27
      %p31 = pneg %p25
      %p32 = scmp.eq.s32.totalorder %s16, 1
      %p33 = por %p31, %p32
      %p34 = scmp.ne.s32.totalorder %s26, %s29
      %p35 = scmp.eq.s32.totalorder %s16, 0
      %p36 = por %p34, %p35
      %p37 = scmp.ne.s32.totalorder %s26, %s29
      %p38 = scmp.eq.s32.totalorder %s21, 1
      %p39 = por %p37, %p38
      %p40 = scmp.ne.s32.totalorder %s29, %s30
      %p41 = scmp.eq.s32.totalorder %s21, 0
      %p42 = por %p40, %p41
      %p43 = scmp.ne.s32.totalorder %s29, %s30
      %p44 = scmp.eq.s32.totalorder %s22, 1
      %p45 = por %p43, %p44
      %p47 = scmp.ne.s32.totalorder %s30, %s46
      %p48 = scmp.eq.s32.totalorder %s22, 0
      %p49 = por %p47, %p48
      %s50 = ssub.s32 %s16, %s23
      %p51 = scmp.eq.s32.totalorder %s50, 0
      %s53 = sadd.s32 %s52, 1
      %s54 = scalar_select %p51, %s52, %s53
      %p57 = pneg %p51
      %p58 = scmp.eq.s32.totalorder %s16, 1
      %p59 = por %p57, %p58
      %p60 = scmp.ne.s32.totalorder %s52, %s55
      %p61 = scmp.eq.s32.totalorder %s16, 0
      %p62 = por %p60, %p61
      %p63 = scmp.ne.s32.totalorder %s52, %s55
      %p64 = scmp.eq.s32.totalorder %s21, 1
      %p65 = por %p63, %p64
      %p66 = scmp.ne.s32.totalorder %s55, %s56
      %p67 = scmp.eq.s32.totalorder %s21, 0
      %p68 = por %p66, %p67
      %p69 = scmp.ne.s32.totalorder %s55, %s56
      %p70 = scmp.eq.s32.totalorder %s22, 1
      %p71 = por %p69, %p70
      %p73 = scmp.ne.s32.totalorder %s56, %s72
      %p74 = scmp.eq.s32.totalorder %s22, 0
      %p75 = por %p73, %p74
      %s77 = sadd.s32 %s76, 1
      %p80 = scmp.eq.s32.totalorder %s16, 1
      %p81 = scmp.ne.s32.totalorder %s76, %s78
      %p82 = scmp.eq.s32.totalorder %s16, 0
      %p83 = por %p81, %p82
      %p84 = scmp.ne.s32.totalorder %s76, %s78
      %p85 = scmp.eq.s32.totalorder %s21, 1
      %p86 = por %p84, %p85
      %p87 = scmp.ne.s32.totalorder %s78, %s79
      %p88 = scmp.eq.s32.totalorder %s21, 0
      %p89 = por %p87, %p88
      %p90 = scmp.ne.s32.totalorder %s78, %s79
      %p91 = scmp.eq.s32.totalorder %s22, 1
      %p92 = por %p90, %p91
      %p94 = scmp.ne.s32.totalorder %s79, %s93
      %p95 = scmp.eq.s32.totalorder %s22, 0
      %p96 = por %p94, %p95
      %s98 = sadd.s32 %s97, 1
      %p101 = scmp.eq.s32.totalorder %s16, 1
      %p102 = scmp.ne.s32.totalorder %s97, %s99
      %p103 = scmp.eq.s32.totalorder %s16, 0
      %p104 = por %p102, %p103
      %p105 = scmp.ne.s32.totalorder %s97, %s99
      %p106 = scmp.eq.s32.totalorder %s21, 1
      %p107 = por %p105, %p106
      %p108 = scmp.ne.s32.totalorder %s99, %s100
      %p109 = scmp.eq.s32.totalorder %s21, 0
      %p110 = por %p108, %p109
      %p111 = scmp.ne.s32.totalorder %s99, %s100
      %p112 = scmp.eq.s32.totalorder %s22, 1
      %p113 = por %p111, %p112
      %p115 = scmp.ne.s32.totalorder %s100, %s114
      %p116 = scmp.eq.s32.totalorder %s22, 0
      %p117 = por %p115, %p116
      %s119 = sadd.s32 %s118, 1
      %p122 = scmp.eq.s32.totalorder %s16, 1
      %p123 = scmp.ne.s32.totalorder %s118, %s120
      %p124 = scmp.eq.s32.totalorder %s16, 0
      %p125 = por %p123, %p124
      %p126 = scmp.ne.s32.totalorder %s118, %s120
      %p127 = scmp.eq.s32.totalorder %s21, 1
      %p128 = por %p126, %p127
      %p129 = scmp.ne.s32.totalorder %s120, %s121
      %p130 = scmp.eq.s32.totalorder %s21, 0
      %p131 = por %p129, %p130
      %p132 = scmp.ne.s32.totalorder %s120, %s121
      %p133 = scmp.eq.s32.totalorder %s22, 1
      %p134 = por %p132, %p133
      %p136 = scmp.ne.s32.totalorder %s121, %s135
      %p137 = scmp.eq.s32.totalorder %s22, 0
      %p138 = por %p136, %p137
      %s140 = sadd.s32 %s139, 1
      %p143 = scmp.eq.s32.totalorder %s16, 1
      %p144 = scmp.ne.s32.totalorder %s139, %s141
      %p145 = scmp.eq.s32.totalorder %s16, 0
      %p146 = por %p144, %p145
      %p147 = scmp.ne.s32.totalorder %s139, %s141
      %p148 = scmp.eq.s32.totalorder %s21, 1
      %p149 = por %p147, %p148
      %p150 = scmp.ne.s32.totalorder %s141, %s142
      %p151 = scmp.eq.s32.totalorder %s21, 0
      %p152 = por %p150, %p151
      %p153 = scmp.ne.s32.totalorder %s141, %s142
      %p154 = scmp.eq.s32.totalorder %s22, 1
      %p155 = por %p153, %p154
      %p157 = scmp.ne.s32.totalorder %s142, %s156
      %p158 = scmp.eq.s32.totalorder %s22, 0
      %p159 = por %p157, %p158
      %s161 = sadd.s32 %s160, 1
      %p164 = scmp.eq.s32.totalorder %s16, 1
      %p165 = scmp.ne.s32.totalorder %s160, %s162
      %p166 = scmp.eq.s32.totalorder %s16, 0
      %p167 = por %p165, %p166
      %p168 = scmp.ne.s32.totalorder %s160, %s162
      %p169 = scmp.eq.s32.totalorder %s21, 1
      %p170 = por %p168, %p169
      %p171 = scmp.ne.s32.totalorder %s162, %s163
      %p172 = scmp.eq.s32.totalorder %s21, 0
      %p173 = por %p171, %p172
      %p174 = scmp.ne.s32.totalorder %s162, %s163
      %p175 = scmp.eq.s32.totalorder %s22, 1
      %p176 = por %p174, %p175
      %p178 = scmp.ne.s32.totalorder %s163, %s177
      %p179 = scmp.eq.s32.totalorder %s22, 0
      %p180 = por %p178, %p179
      %s181 = ssub.s32 %s16, %s23
      %p182 = scmp.eq.s32.totalorder %s181, 0
      %s184 = sadd.s32 %s183, 1
      %s185 = scalar_select %p182, %s183, %s184
      %p188 = pneg %p182
      %p189 = scmp.eq.s32.totalorder %s16, 1
      %p190 = por %p188, %p189
      %p191 = scmp.ne.s32.totalorder %s183, %s186
      %p192 = scmp.eq.s32.totalorder %s16, 0
      %p193 = por %p191, %p192
      %p194 = scmp.ne.s32.totalorder %s183, %s186
      %p195 = scmp.eq.s32.totalorder %s21, 1
      %p196 = por %p194, %p195
      %p197 = scmp.ne.s32.totalorder %s186, %s187
      %p198 = scmp.eq.s32.totalorder %s21, 0
      %p199 = por %p197, %p198
      %p200 = scmp.ne.s32.totalorder %s186, %s187
      %p201 = scmp.eq.s32.totalorder %s22, 1
      %p202 = por %p200, %p201
      %p204 = scmp.ne.s32.totalorder %s187, %s203
      %p205 = scmp.eq.s32.totalorder %s22, 0
      %p206 = por %p204, %p205
      %p207 = scmp.le.s32.totalorder 1, %s16
      %p208 = scmp.lt.s32.totalorder %s16, 3
      %p209 = pnand %p207, %p208
      %p210 = pneg %p209
      // Predicated region
      $region9: #{tpu_custom_call.1} parent=5 // pred_check
        _
      $region10: #{tpu_custom_call.1} parent=5 // pred_check_branch
        %212 = sbr.rel (%p209) target = $region12
      $region11: #{tpu_custom_call.1} parent=5 // pred_region
        %s213 = ssub.s32 %s16, 1
        // Predicated region
        $region13: #{tpu_custom_call.1} parent=11 // pred_check
          %p214 = pneg %p89
        $region14: #{tpu_custom_call.1} parent=11 // pred_check_branch
          %216 = sbr.rel (%p214) target = $region16
        $region15: #{tpu_custom_call.1} parent=11 // pred_region
          _
        $region16: #{tpu_custom_call.1} parent=11 // pred_fallthru
          _
        // Predicated region
        $region17: #{tpu_custom_call.1} parent=11 // pred_check
          %p217 = pneg %p110
        $region18: #{tpu_custom_call.1} parent=11 // pred_check_branch
          %219 = sbr.rel (%p217) target = $region20
        $region19: #{tpu_custom_call.1} parent=11 // pred_region
          _
        $region20: #{tpu_custom_call.1} parent=11 // pred_fallthru
          _
        // Predicated region
        $region21: #{tpu_custom_call.1} parent=11 // pred_check
          %p220 = pneg %p131
        $region22: #{tpu_custom_call.1} parent=11 // pred_check_branch
          %222 = sbr.rel (%p220) target = $region24
        $region23: #{tpu_custom_call.1} parent=11 // pred_region
          _
        $region24: #{tpu_custom_call.1} parent=11 // pred_fallthru
          _
        // Predicated region
        $region25: #{tpu_custom_call.1} parent=11 // pred_check
          %p223 = pneg %p152
        $region26: #{tpu_custom_call.1} parent=11 // pred_check_branch
          %225 = sbr.rel (%p223) target = $region28
        $region27: #{tpu_custom_call.1} parent=11 // pred_region
          _
        $region28: #{tpu_custom_call.1} parent=11 // pred_fallthru
          _
        // Predicated region
        $region29: #{tpu_custom_call.1} parent=11 // pred_check
          %p226 = pneg %p173
        $region30: #{tpu_custom_call.1} parent=11 // pred_check_branch
          %228 = sbr.rel (%p226) target = $region32
        $region31: #{tpu_custom_call.1} parent=11 // pred_region
          _
        $region32: #{tpu_custom_call.1} parent=11 // pred_fallthru
          _
      $region12: #{tpu_custom_call.1} parent=5 // pred_fallthru
        _
      %p229 = scmp.lt.s32.totalorder %s16, 2
      // Predicated region
      $region33: #{tpu_custom_call.1} parent=5 // pred_check
        %p230 = pneg %p229
      $region34: #{tpu_custom_call.1} parent=5 // pred_check_branch
        %232 = sbr.rel (%p230) target = $region36
      $region35: #{tpu_custom_call.1} parent=5 // pred_region
        // Predicated region
        $region37: #{tpu_custom_call.1} parent=35 // pred_check
          %p233 = pneg %p36
        $region38: #{tpu_custom_call.1} parent=35 // pred_check_branch
          %235 = sbr.rel (%p233) target = $region40
        $region39: #{tpu_custom_call.1} parent=35 // pred_region
          %p236 = scmp.lt.s32.totalorder %s16, 1
          %s237 = scalar_select %p236, %s16, 1
          %s238 = smul.addr %s237, 2
          %s239 = smul.addr %s238, 2
          %s240 = scalar_lea.vmem %s0, %s239
        $region40: #{tpu_custom_call.1} parent=35 // pred_fallthru
          _
        // Predicated region
        $region41: #{tpu_custom_call.1} parent=35 // pred_check
          %p241 = pneg %p62
        $region42: #{tpu_custom_call.1} parent=35 // pred_check_branch
          %243 = sbr.rel (%p241) target = $region44
        $region43: #{tpu_custom_call.1} parent=35 // pred_region
          %p244 = scmp.lt.s32.totalorder %s16, 1
          %s245 = scalar_select %p244, %s16, 1
          %s246 = smul.addr %s245, 2
          %s247 = smul.addr %s246, 2
          %s248 = scalar_lea.vmem %s1, %s247
        $region44: #{tpu_custom_call.1} parent=35 // pred_fallthru
          _
      $region36: #{tpu_custom_call.1} parent=5 // pred_fallthru
        _
      %p249 = scmp.le.s32.totalorder 1, %s16
      %p250 = scmp.lt.s32.totalorder %s16, 3
      %p251 = pnand %p249, %p250
      %p252 = pneg %p251
      // Predicated region
      $region45: #{tpu_custom_call.1} parent=5 // pred_check
        _
      $region46: #{tpu_custom_call.1} parent=5 // pred_check_branch
        %254 = sbr.rel (%p251) target = $region48
      $region47: #{tpu_custom_call.1} parent=5 // pred_region
        %s255 = ssub.s32 %s16, 1
        %p256 = scmp.lt.s32.totalorder %s21, 1
        %s257 = scalar_select %p256, %s21, 1
        %s258 = smul.addr %s257, 2
        %s259 = smul.addr %s258, 2
        %s260 = scalar_lea.vmem %s0, %s259
        %p261 = pneg %p42
        %p262 = pneg %p39
        %p263 = scmp.lt.s32.totalorder %s21, 1
        %s264 = scalar_select %p263, %s21, 1
        %s265 = smul.addr %s264, 2
        %s266 = smul.addr %s265, 2
        %s267 = scalar_lea.vmem %s1, %s266
        %p268 = pneg %p68
        %p269 = pneg %p65
        %p270 = pneg %p89
        %p271 = pneg %p86
        %p272 = pneg %p110
        %p273 = pneg %p107
        %p274 = pneg %p131
        %p275 = pneg %p128
        %p276 = pneg %p152
        %p277 = pneg %p149
        %p278 = pneg %p173
        %p279 = pneg %p170
        %p280 = pneg %p199
        %p281 = pneg %p196
        %s282 = sand.u32 %s186, 1
        %s283 = scalar_lea.sflag [#allocation3], %s282
        %s284 = sand.u32 %s186, 1
        %s285 = smul.addr %s284, 64
        %s286 = scalar_lea.vmem [#allocation2], %s285
        %p287 = scmp.lt.s32.totalorder %s21, 1
        %s288 = scalar_select %p287, %s21, 1
        %s289 = smul.addr %s288, 2
        %s290 = smul.addr %s289, 2
        %s291 = scalar_lea.vmem %s0, %s290
        %p292 = scmp.lt.s32.totalorder %s21, 1
        %s293 = scalar_select %p292, %s21, 1
        %s294 = smul.addr %s293, 2
        %s295 = smul.addr %s294, 2
        %s296 = scalar_lea.vmem %s1, %s295
        %v298 = vld [vmem:[%s2] sm:$0xf]
        %v299 = vld [vmem:[%s2 + $0x4] sm:$0xf]
        %v300 = vld [vmem:[%s2 + $0x8] sm:$0xf]
        %v301 = vld [vmem:[%s2 + $0xc] sm:$0xf]
        %v302 = vld [vmem:[%s291] sm:$0xf]
        %v303 = vld [vmem:[%s3] sm:$0xf]
        %v304 = vld [vmem:[%s3 + $0x4] sm:$0xf]
        %v305 = vld [vmem:[%s3 + $0x8] sm:$0xf]
        %v306 = vld [vmem:[%s3 + $0xc] sm:$0xf]
        %v307 = vld [vmem:[%s296] sm:$0xf]
        %v312 = vunpack.c.l.b16 %v303
        %v313 = vunpack.c.l.b16 %v304
        %v314 = vunpack.c.l.b16 %v305
        %v315 = vunpack.c.l.b16 %v306
        %v316 = vpack.c.b16 %v313, %v312
        %v317 = vpack.c.b16 %v315, %v314
        %v320 = vunpack.c.l.s4 1983009808
        %v321 = vunpack.c.0.s8 %v320
        %v322 = vlaneseq
        %v323 = vshrl.u32 %v322, 7
        %v324 = vsub.s32 %v321, %v323
        %v325 = vrot.slane %v307, %v324
        %v326 = vcombine.high %v325, %v325
        %vm327 = vcmask 31744
        %v329 = vsel %vm327, %v316, 0
        %v332 = vsel %vm327, %v317, 0
        %vm334 = vcmask 1041408
        %v336 = vsel %vm334, %v325, 0
        %v339 = vsel %vm334, %v326, 0
        %341 = vmatprep.subr.bf16.mxu0 %v339
        %342 = vmatpush1.bf16.msra.mxu0 %v336
        %343 = vmatprep.subr.bf16.mxu0 0
        %344 = vmatpush1.bf16.msra.mxu0 0
        %345 = vmatprep.subr.bf16.mxu0 0
        %346 = vmatpush1.bf16.msra.mxu0 0
        %347 = vmatprep.subr.bf16.mxu0 0
        %348 = vmatpush1.bf16.msra.mxu0 0
        %349 = vmatprep.subr.bf16.mxu0 0
        %350 = vmatpush1.bf16.msra.mxu0 0
        %351 = vmatprep.subr.bf16.mxu0 0
        %352 = vmatpush1.bf16.msra.mxu0 0
        %353 = vmatprep.subr.bf16.mxu0 0
        %354 = vmatpush1.bf16.msra.mxu0 0
        %355 = vmatprep.subr.bf16.mxu0 0
        %356 = vmatpush1.bf16.msra.mxu0 0
        %357 = vmatprep.subr.bf16.mxu0 0
        %358 = vmatpush1.bf16.msra.mxu0 0
        %359 = vmatprep.subr.bf16.mxu0 0
        %360 = vmatpush1.bf16.msra.mxu0 0
        %361 = vmatprep.subr.bf16.mxu0 0
        %362 = vmatpush1.bf16.msra.mxu0 0
        %363 = vmatprep.subr.bf16.mxu0 0
        %364 = vmatpush1.bf16.msra.mxu0 0
        %365 = vmatprep.subr.bf16.mxu0 0
        %366 = vmatpush1.bf16.msra.mxu0 0
        %367 = vmatprep.subr.bf16.mxu0 0
        %368 = vmatpush1.bf16.msra.mxu0 0
        %369 = vmatprep.subr.bf16.mxu0 0
        %370 = vmatpush1.bf16.msra.mxu0 0
        %371 = vmatprep.subr.bf16.mxu0 0
        %372 = vmatpush1.bf16.msra.mxu0 0
        %373 = vmatprep.mubr.bf16.mxu0 0
        %374 = vmatmul.mubr.bf16.gmra.mrb[0].mxu0 %v329
        %v375 = vpop.f32.mrb[0].mxu0
        %v376 = vadd.f32 0.0, %v375
        %v377 = vpop.f32.mrb[0].mxu0
        %v378 = vadd.f32 0.0, %v377
        %v379 = vpop.f32.mrb[0].mxu0
        %v380 = vadd.f32 0.0, %v379
        %v381 = vpop.f32.mrb[0].mxu0
        %v382 = vadd.f32 0.0, %v381
        %383 = vmatprep.mubr.bf16.mxu0 0
        %384 = vmatmul.mubr.bf16.gmra.mrb[0].mxu0 %v332
        %v385 = vpop.f32.mrb[0].mxu0
        %v386 = vadd.f32 0.0, %v385
        %v387 = vpop.f32.mrb[0].mxu0
        %v388 = vadd.f32 0.0, %v387
        %v389 = vpop.f32.mrb[0].mxu0
        %v390 = vadd.f32 0.0, %v389
        %v391 = vpop.f32.mrb[0].mxu0
        %v392 = vadd.f32 0.0, %v391
        %393 = vdwg.mxu0
        %v398 = vunpack.c.l.b16 %v298
        %v399 = vunpack.c.l.b16 %v299
        %v400 = vunpack.c.l.b16 %v300
        %v401 = vunpack.c.l.b16 %v301
        %v402 = vpack.c.b16 %v399, %v398
        %v403 = vpack.c.b16 %v401, %v400
        %v406 = vunpack.c.l.s4 1983009808
        %v407 = vunpack.c.0.s8 %v406
        %v408 = vlaneseq
        %v409 = vshrl.u32 %v408, 7
        %v410 = vsub.s32 %v407, %v409
        %v411 = vrot.slane %v302, %v410
        %v412 = vcombine.high %v411, %v411
        %v414 = vsel %vm327, %v402, 0
        %v417 = vsel %vm327, %v403, 0
        %v420 = vsel %vm334, %v411, 0
        %v423 = vsel %vm334, %v412, 0
        %425 = vmatprep.subr.bf16.mxu0 %v423
        %426 = vmatpush1.bf16.msra.mxu0 %v420
        %427 = vmatprep.subr.bf16.mxu0 0
        %428 = vmatpush1.bf16.msra.mxu0 0
        %429 = vmatprep.subr.bf16.mxu0 0
        %430 = vmatpush1.bf16.msra.mxu0 0
        %431 = vmatprep.subr.bf16.mxu0 0
        %432 = vmatpush1.bf16.msra.mxu0 0
        %433 = vmatprep.subr.bf16.mxu0 0
        %434 = vmatpush1.bf16.msra.mxu0 0
        %435 = vmatprep.subr.bf16.mxu0 0
        %436 = vmatpush1.bf16.msra.mxu0 0
        %437 = vmatprep.subr.bf16.mxu0 0
        %438 = vmatpush1.bf16.msra.mxu0 0
        %439 = vmatprep.subr.bf16.mxu0 0
        %440 = vmatpush1.bf16.msra.mxu0 0
        %441 = vmatprep.subr.bf16.mxu0 0
        %442 = vmatpush1.bf16.msra.mxu0 0
        %443 = vmatprep.subr.bf16.mxu0 0
        %444 = vmatpush1.bf16.msra.mxu0 0
        %445 = vmatprep.subr.bf16.mxu0 0
        %446 = vmatpush1.bf16.msra.mxu0 0
        %447 = vmatprep.subr.bf16.mxu0 0
        %448 = vmatpush1.bf16.msra.mxu0 0
        %449 = vmatprep.subr.bf16.mxu0 0
        %450 = vmatpush1.bf16.msra.mxu0 0
        %451 = vmatprep.subr.bf16.mxu0 0
        %452 = vmatpush1.bf16.msra.mxu0 0
        %453 = vmatprep.subr.bf16.mxu0 0
        %454 = vmatpush1.bf16.msra.mxu0 0
        %455 = vmatprep.subr.bf16.mxu0 0
        %456 = vmatpush1.bf16.msra.mxu0 0
        %457 = vmatprep.mubr.bf16.mxu0 0
        %458 = vmatmul.mubr.bf16.gmra.mrb[0].mxu0 %v414
        %v459 = vpop.f32.mrb[0].mxu0
        %v460 = vadd.f32 %v376, %v459
        %v461 = vpop.f32.mrb[0].mxu0
        %v462 = vadd.f32 %v378, %v461
        %v463 = vpop.f32.mrb[0].mxu0
        %v464 = vadd.f32 %v380, %v463
        %v465 = vpop.f32.mrb[0].mxu0
        %v466 = vadd.f32 %v382, %v465
        %467 = vmatprep.mubr.bf16.mxu0 0
        %468 = vmatmul.mubr.bf16.gmra.mrb[0].mxu0 %v417
        %v469 = vpop.f32.mrb[0].mxu0
        %v470 = vadd.f32 %v386, %v469
        %v471 = vpop.f32.mrb[0].mxu0
        %v472 = vadd.f32 %v388, %v471
        %v473 = vpop.f32.mrb[0].mxu0
        %v474 = vadd.f32 %v390, %v473
        %v475 = vpop.f32.mrb[0].mxu0
        %v476 = vadd.f32 %v392, %v475
        %477 = vdwg.mxu0
        %v478 = vld [vmem:[%s4] sm:$0xff]
        %v479 = vld [vmem:[%s4 + $0x8] sm:$0xff]
        %v480 = vld [vmem:[%s4 + $0x10] sm:$0xff]
        %v481 = vld [vmem:[%s4 + $0x18] sm:$0xff]
        %483 = vset.pattern.permute.xlu0 0
        %484 = vperm.xlu0 %483, %v478
        %v485 = vpop.permute.xlu0 %484
        %488 = vset.pattern.permute.xlu0 0
        %489 = vperm.xlu0 %488, %v479
        %v490 = vpop.permute.xlu0 %489
        %493 = vset.pattern.permute.xlu0 0
        %494 = vperm.xlu0 %493, %v480
        %v495 = vpop.permute.xlu0 %494
        %498 = vset.pattern.permute.xlu0 0
        %499 = vperm.xlu0 %498, %v481
        %v500 = vpop.permute.xlu0 %499
        %v502 = vadd.f32 %v460, %v485
        %v503 = vadd.f32 %v462, %v485
        %v504 = vadd.f32 %v464, %v490
        %v505 = vadd.f32 %v466, %v490
        %v506 = vadd.f32 %v470, %v495
        %v507 = vadd.f32 %v472, %v495
        %v508 = vadd.f32 %v474, %v500
        %v509 = vadd.f32 %v476, %v500
        %v510 = vmax.f32 %v502, 0.0
        %v511 = vmax.f32 %v503, 0.0
        %v512 = vmax.f32 %v504, 0.0
        %v513 = vmax.f32 %v505, 0.0
        %v514 = vmax.f32 %v506, 0.0
        %v515 = vmax.f32 %v507, 0.0
        %v516 = vmax.f32 %v508, 0.0
        %v517 = vmax.f32 %v509, 0.0
        %v518 = vadd.f32 %v510, %v511
        %519 = vadd.xlane.f32.xlu0 %v518
        %v520 = vpop.xlane.xlu0 %519
        %v521 = vadd.f32 %v512, %v513
        %522 = vadd.xlane.f32.xlu0 %v521
        %v523 = vpop.xlane.xlu0 %522
        %v524 = vadd.f32 %v514, %v515
        %525 = vadd.xlane.f32.xlu0 %v524
        %v526 = vpop.xlane.xlu0 %525
        %v527 = vadd.f32 %v516, %v517
        %528 = vadd.xlane.f32.xlu0 %v527
        %v529 = vpop.xlane.xlu0 %528
        %v530 = vrcp.pop 256.0
        %v531 = vmul.f32 %v520, %v530
        %v532 = vmul.f32 %v523, %v530
        %v533 = vmul.f32 %v526, %v530
        %v534 = vmul.f32 %v529, %v530
        %v535 = vld [vmem:[%s5] sm:$0xff]
        %vm536 = vcmask 261120
        %v538 = vsel %vm536, %v535, 0
        %540 = vmatprep.subr.mxu0 0.0
        %541 = vmatpush1.msra.mxu0 %v531
        %542 = vmatprep.subr.mxu0 0.0
        %543 = vmatpush1.msra.mxu0 %v532
        %544 = vmatprep.subr.mxu0 0.0
        %545 = vmatpush1.msra.mxu0 %v533
        %546 = vmatprep.subr.mxu0 0.0
        %547 = vmatpush1.msra.mxu0 %v534
        %548 = vmatprep.subr.mxu0 0.0
        %549 = vmatpush1.msra.mxu0 0.0
        %550 = vmatprep.subr.mxu0 0.0
        %551 = vmatpush1.msra.mxu0 0.0
        %552 = vmatprep.subr.mxu0 0.0
        %553 = vmatpush1.msra.mxu0 0.0
        %554 = vmatprep.subr.mxu0 0.0
        %555 = vmatpush1.msra.mxu0 0.0
        %556 = vmatprep.subr.mxu0 0.0
        %557 = vmatpush1.msra.mxu0 0.0
        %558 = vmatprep.subr.mxu0 0.0
        %559 = vmatpush1.msra.mxu0 0.0
        %560 = vmatprep.subr.mxu0 0.0
        %561 = vmatpush1.msra.mxu0 0.0
        %562 = vmatprep.subr.mxu0 0.0
        %563 = vmatpush1.msra.mxu0 0.0
        %564 = vmatprep.subr.mxu0 0.0
        %565 = vmatpush1.msra.mxu0 0.0
        %566 = vmatprep.subr.mxu0 0.0
        %567 = vmatpush1.msra.mxu0 0.0
        %568 = vmatprep.subr.mxu0 0.0
        %569 = vmatpush1.msra.mxu0 0.0
        %570 = vmatprep.subr.mxu0 0.0
        %571 = vmatpush1.msra.mxu0 0.0
        %572 = vmatprep.subr.mxu0 0.0
        %573 = vmatpush1.msra.mxu0 0.0
        %574 = vmatprep.subr.mxu0 0.0
        %575 = vmatpush1.msra.mxu0 0.0
        %576 = vmatprep.subr.mxu0 0.0
        %577 = vmatpush1.msra.mxu0 0.0
        %578 = vmatprep.subr.mxu0 0.0
        %579 = vmatpush1.msra.mxu0 0.0
        %580 = vmatprep.subr.mxu0 0.0
        %581 = vmatpush1.msra.mxu0 0.0
        %582 = vmatprep.subr.mxu0 0.0
        %583 = vmatpush1.msra.mxu0 0.0
        %584 = vmatprep.subr.mxu0 0.0
        %585 = vmatpush1.msra.mxu0 0.0
        %586 = vmatprep.subr.mxu0 0.0
        %587 = vmatpush1.msra.mxu0 0.0
        %588 = vmatprep.subr.mxu0 0.0
        %589 = vmatpush1.msra.mxu0 0.0
        %590 = vmatprep.subr.mxu0 0.0
        %591 = vmatpush1.msra.mxu0 0.0
        %592 = vmatprep.subr.mxu0 0.0
        %593 = vmatpush1.msra.mxu0 0.0
        %594 = vmatprep.subr.mxu0 0.0
        %595 = vmatpush1.msra.mxu0 0.0
        %596 = vmatprep.subr.mxu0 0.0
        %597 = vmatpush1.msra.mxu0 0.0
        %598 = vmatprep.subr.mxu0 0.0
        %599 = vmatpush1.msra.mxu0 0.0
        %600 = vmatprep.subr.mxu0 0.0
        %601 = vmatpush1.msra.mxu0 0.0
        %602 = vmatprep.subr.mxu0 0.0
        %603 = vmatpush1.msra.mxu0 0.0
        %604 = vmatprep.mubr.f32.mxu0 0.0
        %605 = vmatmul.mubr.f32.gmra.mrb[0].mxu0 %v538
        %v606 = vpop.f32.mrb[0].mxu0
        %v607 = vadd.f32 0.0, %v606
        %v608 = vpop.f32.mrb[0].mxu0
        %609 = vdwg.mxu0
        %v610 = vmax.f32 %v607, 0.0
        %v611 = vld [vmem:[%s6] sm:$0xff]
        %v612 = vld [vmem:[%s6 + $0x8] sm:$0xff]
        %v613 = vld [vmem:[%s6 + $0x10] sm:$0xff]
        %v614 = vld [vmem:[%s6 + $0x18] sm:$0xff]
        %vm615 = vcmask 64512
        %v617 = vsel %vm615, %v611, 0
        %v620 = vsel %vm615, %v612, 0
        %v623 = vsel %vm615, %v613, 0
        %v626 = vsel %vm615, %v614, 0
        %628 = vmatprep.subr.mxu0 0.0
        %629 = vmatpush1.msra.mxu0 %v610
        %630 = vmatprep.subr.mxu0 0.0
        %631 = vmatpush1.msra.mxu0 0.0
        %632 = vmatprep.subr.mxu0 0.0
        %633 = vmatpush1.msra.mxu0 0.0
        %634 = vmatprep.subr.mxu0 0.0
        %635 = vmatpush1.msra.mxu0 0.0
        %636 = vmatprep.subr.mxu0 0.0
        %637 = vmatpush1.msra.mxu0 0.0
        %638 = vmatprep.subr.mxu0 0.0
        %639 = vmatpush1.msra.mxu0 0.0
        %640 = vmatprep.subr.mxu0 0.0
        %641 = vmatpush1.msra.mxu0 0.0
        %642 = vmatprep.subr.mxu0 0.0
        %643 = vmatpush1.msra.mxu0 0.0
        %644 = vmatprep.subr.mxu0 0.0
        %645 = vmatpush1.msra.mxu0 0.0
        %646 = vmatprep.subr.mxu0 0.0
        %647 = vmatpush1.msra.mxu0 0.0
        %648 = vmatprep.subr.mxu0 0.0
        %649 = vmatpush1.msra.mxu0 0.0
        %650 = vmatprep.subr.mxu0 0.0
        %651 = vmatpush1.msra.mxu0 0.0
        %652 = vmatprep.subr.mxu0 0.0
        %653 = vmatpush1.msra.mxu0 0.0
        %654 = vmatprep.subr.mxu0 0.0
        %655 = vmatpush1.msra.mxu0 0.0
        %656 = vmatprep.subr.mxu0 0.0
        %657 = vmatpush1.msra.mxu0 0.0
        %658 = vmatprep.subr.mxu0 0.0
        %659 = vmatpush1.msra.mxu0 0.0
        %660 = vmatprep.subr.mxu0 0.0
        %661 = vmatpush1.msra.mxu0 0.0
        %662 = vmatprep.subr.mxu0 0.0
        %663 = vmatpush1.msra.mxu0 0.0
        %664 = vmatprep.subr.mxu0 0.0
        %665 = vmatpush1.msra.mxu0 0.0
        %666 = vmatprep.subr.mxu0 0.0
        %667 = vmatpush1.msra.mxu0 0.0
        %668 = vmatprep.subr.mxu0 0.0
        %669 = vmatpush1.msra.mxu0 0.0
        %670 = vmatprep.subr.mxu0 0.0
        %671 = vmatpush1.msra.mxu0 0.0
        %672 = vmatprep.subr.mxu0 0.0
        %673 = vmatpush1.msra.mxu0 0.0
        %674 = vmatprep.subr.mxu0 0.0
        %675 = vmatpush1.msra.mxu0 0.0
        %676 = vmatprep.subr.mxu0 0.0
        %677 = vmatpush1.msra.mxu0 0.0
        %678 = vmatprep.subr.mxu0 0.0
        %679 = vmatpush1.msra.mxu0 0.0
        %680 = vmatprep.subr.mxu0 0.0
        %681 = vmatpush1.msra.mxu0 0.0
        %682 = vmatprep.subr.mxu0 0.0
        %683 = vmatpush1.msra.mxu0 0.0
        %684 = vmatprep.subr.mxu0 0.0
        %685 = vmatpush1.msra.mxu0 0.0
        %686 = vmatprep.subr.mxu0 0.0
        %687 = vmatpush1.msra.mxu0 0.0
        %688 = vmatprep.subr.mxu0 0.0
        %689 = vmatpush1.msra.mxu0 0.0
        %690 = vmatprep.subr.mxu0 0.0
        %691 = vmatpush1.msra.mxu0 0.0
        %692 = vmatprep.mubr.f32.mxu0 0.0
        %693 = vmatmul.mubr.f32.gmra.mrb[0].mxu0 %v617
        %v694 = vpop.f32.mrb[0].mxu0
        %v695 = vadd.f32 0.0, %v694
        %v696 = vpop.f32.mrb[0].mxu0
        %697 = vmatprep.mubr.f32.mxu0 0.0
        %698 = vmatmul.mubr.f32.gmra.mrb[0].mxu0 %v620
        %v699 = vpop.f32.mrb[0].mxu0
        %v700 = vadd.f32 0.0, %v699
        %v701 = vpop.f32.mrb[0].mxu0
        %702 = vmatprep.mubr.f32.mxu0 0.0
        %703 = vmatmul.mubr.f32.gmra.mrb[0].mxu0 %v623
        %v704 = vpop.f32.mrb[0].mxu0
        %v705 = vadd.f32 0.0, %v704
        %v706 = vpop.f32.mrb[0].mxu0
        %707 = vmatprep.mubr.f32.mxu0 0.0
        %708 = vmatmul.mubr.f32.gmra.mrb[0].mxu0 %v626
        %v709 = vpop.f32.mrb[0].mxu0
        %v710 = vadd.f32 0.0, %v709
        %v711 = vpop.f32.mrb[0].mxu0
        %712 = vdwg.mxu0
        %v713 = vsub.f32 0.0, %v695
        %v714 = vsub.f32 0.0, %v700
        %v715 = vsub.f32 0.0, %v705
        %v716 = vsub.f32 0.0, %v710
        %v717 = vmul.f32 %v713, 1.442695
        %v718 = vpow.pop %v717
        %v719 = vmul.f32 %v714, 1.442695
        %v720 = vpow.pop %v719
        %v721 = vmul.f32 %v715, 1.442695
        %v722 = vpow.pop %v721
        %v723 = vmul.f32 %v716, 1.442695
        %v724 = vpow.pop %v723
        %v725 = vadd.f32 %v718, 1.0
        %v726 = vadd.f32 %v720, 1.0
        %v727 = vadd.f32 %v722, 1.0
        %v728 = vadd.f32 %v724, 1.0
        %v729 = vrcp.pop %v725
        %v730 = vmul.f32 1.0, %v729
        %v731 = vrcp.pop %v726
        %v732 = vmul.f32 1.0, %v731
        %v733 = vrcp.pop %v727
        %v734 = vmul.f32 1.0, %v733
        %v735 = vrcp.pop %v728
        %v736 = vmul.f32 1.0, %v735
        %v737 = vadd.f32 %v730, 1.0
        %v738 = vadd.f32 %v732, 1.0
        %v739 = vadd.f32 %v734, 1.0
        %v740 = vadd.f32 %v736, 1.0
        %742 = vset.pattern.permute.xlu0 0
        %743 = vperm.xlu0 %742, %v737
        %v744 = vpop.permute.xlu0 %743
        %747 = vset.pattern.permute.xlu0 0
        %748 = vperm.xlu0 %747, %v738
        %v749 = vpop.permute.xlu0 %748
        %752 = vset.pattern.permute.xlu0 0
        %753 = vperm.xlu0 %752, %v739
        %v754 = vpop.permute.xlu0 %753
        %757 = vset.pattern.permute.xlu0 0
        %758 = vperm.xlu0 %757, %v740
        %v759 = vpop.permute.xlu0 %758
        %v761 = vmul.f32 %v510, %v744
        %v762 = vmul.f32 %v511, %v744
        %v763 = vmul.f32 %v512, %v749
        %v764 = vmul.f32 %v513, %v749
        %v765 = vmul.f32 %v514, %v754
        %v766 = vmul.f32 %v515, %v754
        %v767 = vmul.f32 %v516, %v759
        %v768 = vmul.f32 %v517, %v759
        %769 = vst [vmem:[%s286] sm:$0xff] %v761
        %770 = vst [vmem:[%s286 + $0x8] sm:$0xff] %v762
        %771 = vst [vmem:[%s286 + $0x10] sm:$0xff] %v763
        %772 = vst [vmem:[%s286 + $0x18] sm:$0xff] %v764
        %773 = vst [vmem:[%s286 + $0x20] sm:$0xff] %v765
        %774 = vst [vmem:[%s286 + $0x28] sm:$0xff] %v766
        %775 = vst [vmem:[%s286 + $0x30] sm:$0xff] %v767
        %776 = vst [vmem:[%s286 + $0x38] sm:$0xff] %v768
        %s777 = sand.u32 %s186, 1
        %s778 = scalar_lea.sflag [#allocation3], %s777
        %s779 = sand.u32 %s186, 1
        %s780 = smul.addr %s779, 64
        %s781 = scalar_lea.vmem [#allocation2], %s780
        // Predicated region
        $region49: #{tpu_custom_call.1} parent=47 // pred_check
          %p782 = pneg %p196
        $region50: #{tpu_custom_call.1} parent=47 // pred_check_branch
          %784 = sbr.rel (%p782) target = $region52
        $region51: #{tpu_custom_call.1} parent=47 // pred_region
          %s786 = ssub.s32 1024, 1024
          %787 = vsyncadd %s778, %s786
          %s788 = smul.addr %s21, 8
          %s789 = smul.addr %s788, 128
          %s790 = scalar_lea.hbm %s7, %s789
          %s791 = sshll.u32 %s781, 4
          %s792 = int_to_ptr.vmem [resolvable:$true] %s791
          %797 = dma.vmem_to_hbm [thread:$0]  %s792, 1024, %s790, %s778, 256, 256, 16
        $region52: #{tpu_custom_call.1} parent=47 // pred_fallthru
          _
      $region48: #{tpu_custom_call.1} parent=5 // pred_fallthru
        _
      %p798 = scmp.le.s32.totalorder 2, %s16
      // Predicated region
      $region53: #{tpu_custom_call.1} parent=5 // pred_check
        %p799 = pneg %p798
      $region54: #{tpu_custom_call.1} parent=5 // pred_check_branch
        %801 = sbr.rel (%p799) target = $region56
      $region55: #{tpu_custom_call.1} parent=5 // pred_region
        %s802 = ssub.s32 %s16, 2
        // Predicated region
        $region57: #{tpu_custom_call.1} parent=55 // pred_check
          %p803 = pneg %p202
        $region58: #{tpu_custom_call.1} parent=55 // pred_check_branch
          %805 = sbr.rel (%p803) target = $region60
        $region59: #{tpu_custom_call.1} parent=55 // pred_region
          %s806 = sand.u32 %s187, 1
          %s807 = scalar_lea.sflag [#allocation3], %s806
          %s808 = sand.u32 %s187, 1
          %s809 = smul.addr %s808, 64
          %s810 = scalar_lea.vmem [#allocation2], %s809
          %811 = dma.done %s807, 1024
        $region60: #{tpu_custom_call.1} parent=55 // pred_fallthru
          _
      $region56: #{tpu_custom_call.1} parent=5 // pred_fallthru
        _
    $region6: #{tpu_custom_call.1} parent=1 // loop_footer
      %s20 = sadd.s32 1, %s16
    $region7: #{tpu_custom_call.1} parent=1 // loop_footer_branch
      %15 = sbr.rel target = $region3
    $region8: #{tpu_custom_call.1} parent=1 // loop_exit
      _
    %812 = vsyncpa [#allocation3], 1
    %s813 = scalar_lea.sflag [#allocation3], 1
    %814 = vsyncpa %s813, 1

</llo_original>
